<compile_context>
chip_gen: v7x
topology: tpu7x:2x2x1
jax: 0.10.0
libtpu: 0.0.40
codegen_flags: <defaults>
</compile_context>

<pallas_src>
import functools

import jax
import jax.numpy as jnp
from jax import lax
from jax.experimental import pallas as pl
from jax.experimental.pallas import tpu as pltpu

LANES = 128
MAX_BLOCK_ROWS = 2048   # (2048, 128) f32 block = 1 MiB per input
NUM_CORES = 2           # leading "parallel" grid axis (megacore split on v7x)


def _round_up(v, m):
    return ((v + m - 1) // m) * m


def _focal_loss_kernel(x_ref, t_ref, out_ref, *, gamma, block_rows, inner,
                       rows, full_blocks, inv_n, needs_mask, binary_targets):
    c = pl.program_id(0)          # core / row-range index ("parallel")
    i = pl.program_id(1)          # inner block index ("arbitrary")
    n_inner = pl.num_programs(1)

    # The output block (8,128) is the per-core accumulator (same block index
    # across the whole inner axis).
    @pl.when(i == 0)
    def _():
        out_ref[...] = jnp.zeros_like(out_ref)

    x = x_ref[...].astype(jnp.float32)
    t = t_ref[...].astype(jnp.float32)

    # ---- elementwise focal loss (hot path) ----
    xt = x * t
    # Exact rewrite of: x - x*t + relu(-x) + log(exp(-relu(-x)) + exp(-x-relu(-x)))
    #                == relu(x) - x*t + log1p(exp(-|x|))
    softplus_x = jnp.log1p(jnp.exp(-jnp.abs(x)))
    loss = jnp.maximum(x, 0.0) - xt + softplus_x

    # z = -x*(2t-1) == x - 2*x*t (reuses xt).
    z = x - 2.0 * xt
    if binary_targets:
        # For t in {0,1}: |z| == |x| exactly -> reuse softplus_x.
        invprobs = jnp.minimum(z, 0.0) - softplus_x
    else:
        invprobs = jnp.minimum(z, 0.0) - jnp.log1p(jnp.exp(-jnp.abs(z)))
    loss = jnp.exp(invprobs * jnp.float32(gamma)) * loss

    # ---- block-local reduction into the (8, 128) accumulator ----
    def accumulate(vals):
        out_ref[...] += vals.reshape(block_rows // 8, 8, LANES).sum(axis=0)

    if needs_mask:
        gb = c * inner + i                    # logical (unclamped) block id
        valid_rows = rows - gb * block_rows   # in-bounds rows of this block

        @pl.when(gb < full_blocks)            # fully valid block: no mask
        def _():
            accumulate(loss)

        @pl.when(gb >= full_blocks)           # partial / fully-OOB block
        def _():
            row_idx = lax.broadcasted_iota(jnp.int32, loss.shape, 0)
            # Mask BEFORE the sum (OOB garbage may be NaN/Inf; where is a select).
            accumulate(jnp.where(row_idx < valid_rows, loss, 0.0))
    else:
        accumulate(loss)

    # ---- finalize: fold 1/n into the per-core partial ----
    @pl.when(i == n_inner - 1)
    def _():
        out_ref[...] = out_ref[...] * jnp.float32(inv_n)


def _focal_loss_elementwise_ref(x, t, gamma):
    """Plain-JAX elementwise focal loss matching the PyTorch module exactly."""
    x = x.astype(jnp.float32)
    t = t.astype(jnp.float32)
    max_val = jnp.maximum(-x, 0.0)
    loss = x - x * t + max_val + jnp.log(jnp.exp(-max_val) + jnp.exp(-x - max_val))
    invprobs = jax.nn.log_sigmoid(-x * (t * 2.0 - 1.0))
    return jnp.exp(invprobs * gamma) * loss


def focal_loss(x, target, gamma, *, binary_targets=True):
    """Mean binary focal loss over all elements. x, target: same shape.

    Inputs may be any float/int dtype (bf16 logits, int8/bool targets are fine;
    the kernel casts per block).  Set binary_targets=False for soft targets.
    """
    if x.shape != target.shape:
        raise ValueError(
            "Target size ({}) must be the same as input size ({})".format(
                target.shape, x.shape))
    n = x.size
    inv_n = 1.0 / float(n)

    x_flat = x.reshape(-1)
    t_flat = target.reshape(-1)

    tail = n % LANES
    n_main = n - tail

    # Ragged tail (<128 elems): tiny plain-JAX expression, no whole-array pad.
    if tail:
        tail_sum = jnp.sum(
            _focal_loss_elementwise_ref(x_flat[n_main:], t_flat[n_main:], gamma))
        tail_part = tail_sum * jnp.float32(inv_n)
        x_main = x_flat[:n_main]
        t_main = t_flat[:n_main]
    else:
        tail_part = jnp.float32(0.0)
        x_main = x_flat
        t_main = t_flat

    if n_main == 0:
        return tail_part

    rows = n_main // LANES
    x2d = x_main.reshape(rows, LANES)   # lane-dense slab, original dtype
    t2d = t_main.reshape(rows, LANES)

    # Multiple of 32 rows so f32 / bf16 / int8 sublane tiles all divide evenly.
    block_rows = min(MAX_BLOCK_ROWS, _round_up(rows, 32))
    total_blocks = pl.cdiv(rows, block_rows)
    ncores = NUM_CORES if total_blocks >= NUM_CORES else 1
    inner = pl.cdiv(total_blocks, ncores)
    full_blocks = rows // block_rows
    needs_mask = (ncores * inner * block_rows) != rows

    kernel = functools.partial(
        _focal_loss_kernel,
        gamma=float(gamma),
        block_rows=block_rows,
        inner=inner,
        rows=rows,
        full_blocks=full_blocks,
        inv_n=inv_n,
        needs_mask=needs_mask,
        binary_targets=binary_targets,
    )

    def in_idx(c, i):
        # Clamp so a grid step past the last real block re-reads the final
        # block (its contribution is fully masked via the unclamped index).
        return (jnp.minimum(c * inner + i, total_blocks - 1), 0)

    if inner >= 3:
        in_spec = pl.BlockSpec((block_rows, LANES), in_idx,
                               pipeline_mode=pl.Buffered(3))
    else:
        in_spec = pl.BlockSpec((block_rows, LANES), in_idx)

    bytes_accessed = (x2d.size * x2d.dtype.itemsize
                      + t2d.size * t2d.dtype.itemsize
                      + ncores * 8 * LANES * 4)

    partials = pl.pallas_call(
        kernel,
        out_shape=jax.ShapeDtypeStruct((ncores * 8, LANES), jnp.float32),
        grid_spec=pltpu.PrefetchScalarGridSpec(
            num_scalar_prefetch=0,
            grid=(ncores, inner),
            in_specs=[in_spec, in_spec],
            out_specs=pl.BlockSpec((8, LANES), lambda c, i: (c, 0)),
        ),
        compiler_params=pltpu.CompilerParams(
            dimension_semantics=("parallel", "arbitrary"),
            vmem_limit_bytes=32 * 1024 * 1024,
        ),
        cost_estimate=pl.CostEstimate(
            flops=16 * n_main,
            transcendentals=(3 if binary_targets else 4) * n_main,
            bytes_accessed=int(bytes_accessed),
        ),
    )(x2d, t2d)

    # Per-core partials are already scaled by 1/n; just add them (and the tail).
    return jnp.sum(partials) + tail_part


def focal_loss_ref(x, target, gamma):
    """Pure-JAX reference matching the PyTorch module exactly."""
    return jnp.mean(_focal_loss_elementwise_ref(x, target, gamma))


if __name__ == "__main__":
    key = jax.random.PRNGKey(0)
    keys = jax.random.split(key, 6)
    gamma = 2.0

    # Test 1: NCHW logits with binary segmentation targets (the intended use).
    x1 = jax.random.normal(keys[0], (2, 4, 16, 16), dtype=jnp.float32) * 2.0
    t1 = (jax.random.uniform(keys[1], (2, 4, 16, 16)) > 0.5).astype(jnp.float32)
    out1 = jax.block_until_ready(focal_loss(x1, t1, gamma))
    ref1 = focal_loss_ref(x1, t1, gamma)
    assert jnp.allclose(out1, ref1, rtol=1e-5, atol=1e-6), (out1, ref1)

    # Test 2: ragged size (n % 128 != 0) + soft targets -> JAX tail + general path.
    x2 = jax.random.normal(keys[2], (3, 5, 7, 11), dtype=jnp.float32) * 2.0
    t2 = jax.random.uniform(keys[3], (3, 5, 7, 11), dtype=jnp.float32)
    out2 = jax.block_until_ready(focal_loss(x2, t2, gamma, binary_targets=False))
    ref2 = focal_loss_ref(x2, t2, gamma)
    assert jnp.allclose(out2, ref2, rtol=1e-5, atol=1e-6), (out2, ref2)

    # Test 3: larger input exercising the 2-core grid, multi-block masking,
    # Buffered(3) pipelining, bf16 logits and int8 targets (reduced HBM bytes).
    x3 = (jax.random.normal(keys[4], (2, 4, 320, 416), dtype=jnp.float32) * 2.0
          ).astype(jnp.bfloat16)
    t3 = (jax.random.uniform(keys[5], (2, 4, 320, 416)) > 0.5).astype(jnp.int8)
    out3 = jax.block_until_ready(focal_loss(x3, t3, gamma))
    ref3 = focal_loss_ref(x3.astype(jnp.float32), t3.astype(jnp.float32), gamma)
    assert jnp.allclose(out3, ref3, rtol=1e-5, atol=1e-6), (out3, ref3)

    print("KERNEL_OK")
</pallas_src>

<mosaic_0001>
module attributes {stable_mosaic.version = 11 : i64} {
  func.func @_focal_loss_kernel(%arg0: i32, %arg1: i32, %arg2: memref<32x128xf32, #tpu.memory_space<vmem>>, %arg3: memref<32x128xf32, #tpu.memory_space<vmem>>, %arg4: memref<8x128xf32, #tpu.memory_space<vmem>>) attributes {dimension_semantics = [#tpu.dimension_semantics<parallel>, #tpu.dimension_semantics<arbitrary>], iteration_bounds = array<i64: 1, 1>, scalar_prefetch = 0 : i64, scratch_operands = 0 : i64, tpu.core_type = #tpu.core_type<tc>, window_params = [{transform_indices = @transform_0, window_bounds = array<i64: 32, 128>}, {transform_indices = @transform_1, window_bounds = array<i64: 32, 128>}, {transform_indices = @transform_2, window_bounds = array<i64: 8, 128>}]} {
    %c0_i32 = arith.constant 0 : i32
    %0 = arith.cmpi eq, %arg1, %c0_i32 : i32
    %1 = arith.extui %0 : i1 to i32
    %c0_i32_0 = arith.constant 0 : i32
    %2 = arith.cmpi ne, %1, %c0_i32_0 : i32
    scf.if %2 {
      %cst_14 = arith.constant 0.000000e+00 : f32
      %38 = vector.broadcast %cst_14 : f32 to vector<8x128xf32>
      %c0_15 = arith.constant 0 : index
      %c0_16 = arith.constant 0 : index
      %39 = vector.load %arg4[%c0_15, %c0_16] : memref<8x128xf32, #tpu.memory_space<vmem>>, vector<8x128xf32>
      tpu.vector_store %arg4[%c0_15, %c0_16], %38 {strides = array<i32>} : memref<8x128xf32, #tpu.memory_space<vmem>>, vector<8x128xf32>,
    } else {
    }
    %c0 = arith.constant 0 : index
    %c0_1 = arith.constant 0 : index
    %3 = vector.load %arg2[%c0, %c0_1] : memref<32x128xf32, #tpu.memory_space<vmem>>, vector<32x128xf32>
    %c0_2 = arith.constant 0 : index
    %c0_3 = arith.constant 0 : index
    %4 = vector.load %arg3[%c0_2, %c0_3] : memref<32x128xf32, #tpu.memory_space<vmem>>, vector<32x128xf32>
    %5 = arith.mulf %3, %4 : vector<32x128xf32>
    %6 = math.absf %3 : vector<32x128xf32>
    %cst = arith.constant 0.000000e+00 : f32
    %7 = vector.broadcast %cst : f32 to vector<32x128xf32>
    %8 = arith.subf %7, %6 : vector<32x128xf32>
    %9 = math.exp %8 : vector<32x128xf32>
    %10 = math.log1p %9 : vector<32x128xf32>
    %cst_4 = arith.constant 0.000000e+00 : f32
    %11 = vector.broadcast %cst_4 : f32 to vector<32x128xf32>
    %12 = arith.maximumf %3, %11 : vector<32x128xf32>
    %13 = arith.subf %12, %5 : vector<32x128xf32>
    %14 = arith.addf %13, %10 : vector<32x128xf32>
    %cst_5 = arith.constant 2.000000e+00 : f32
    %15 = vector.broadcast %cst_5 : f32 to vector<32x128xf32>
    %16 = arith.mulf %15, %5 : vector<32x128xf32>
    %17 = arith.subf %3, %16 : vector<32x128xf32>
    %cst_6 = arith.constant 0.000000e+00 : f32
    %18 = vector.broadcast %cst_6 : f32 to vector<32x128xf32>
    %19 = arith.minimumf %17, %18 : vector<32x128xf32>
    %20 = arith.subf %19, %10 : vector<32x128xf32>
    %cst_7 = arith.constant 2.000000e+00 : f32
    %21 = vector.broadcast %cst_7 : f32 to vector<32x128xf32>
    %22 = arith.mulf %20, %21 : vector<32x128xf32>
    %23 = math.exp %22 : vector<32x128xf32>
    %24 = arith.mulf %23, %14 : vector<32x128xf32>
    %c1_i32 = arith.constant 1 : i32
    %25 = arith.muli %arg0, %c1_i32 : i32
    %26 = arith.addi %25, %arg1 : i32
    %c32_i32 = arith.constant 32 : i32
    %27 = arith.muli %26, %c32_i32 : i32
    %c16_i32 = arith.constant 16 : i32
    %28 = arith.subi %c16_i32, %27 : i32
    %c0_i32_8 = arith.constant 0 : i32
    %29 = arith.cmpi slt, %26, %c0_i32_8 : i32
    %30 = arith.extui %29 : i1 to i32
    %c0_i32_9 = arith.constant 0 : i32
    %31 = arith.cmpi ne, %30, %c0_i32_9 : i32
    scf.if %31 {
      %c0_14 = arith.constant 0 : index
      %c0_15 = arith.constant 0 : index
      %38 = vector.load %arg4[%c0_14, %c0_15] : memref<8x128xf32, #tpu.memory_space<vmem>>, vector<8x128xf32>
      %39 = vector.shape_cast %24 : vector<32x128xf32> to vector<4x8x128xf32>
      %cst_16 = arith.constant dense<0.000000e+00> : vector<8x128xf32>
      %40 = vector.multi_reduction <add>, %39, %cst_16 [0] : vector<4x8x128xf32> to vector<8x128xf32>
      %41 = arith.addf %38, %40 : vector<8x128xf32>
      %c0_17 = arith.constant 0 : index
      %c0_18 = arith.constant 0 : index
      %42 = vector.load %arg4[%c0_17, %c0_18] : memref<8x128xf32, #tpu.memory_space<vmem>>, vector<8x128xf32>
      tpu.vector_store %arg4[%c0_17, %c0_18], %41 {strides = array<i32>} : memref<8x128xf32, #tpu.memory_space<vmem>>, vector<8x128xf32>,
    } else {
    }
    %c0_i32_10 = arith.constant 0 : i32
    %32 = arith.cmpi sge, %26, %c0_i32_10 : i32
    %33 = arith.extui %32 : i1 to i32
    %c0_i32_11 = arith.constant 0 : i32
    %34 = arith.cmpi ne, %33, %c0_i32_11 : i32
    scf.if %34 {
      %38 = tpu.iota {dimensions = array<i32: 0>} : vector<32x128xi32>
      %39 = vector.broadcast %28 : i32 to vector<32x128xi32>
      %40 = arith.cmpi slt, %38, %39 : vector<32x128xi32>
      %cst_14 = arith.constant 0.000000e+00 : f32
      %41 = vector.broadcast %cst_14 : f32 to vector<32x128xf32>
      %42 = arith.select %40, %24, %41 : vector<32x128xi1>, vector<32x128xf32>
      %c0_15 = arith.constant 0 : index
      %c0_16 = arith.constant 0 : index
      %43 = vector.load %arg4[%c0_15, %c0_16] : memref<8x128xf32, #tpu.memory_space<vmem>>, vector<8x128xf32>
      %44 = vector.shape_cast %42 : vector<32x128xf32> to vector<4x8x128xf32>
      %cst_17 = arith.constant dense<0.000000e+00> : vector<8x128xf32>
      %45 = vector.multi_reduction <add>, %44, %cst_17 [0] : vector<4x8x128xf32> to vector<8x128xf32>
      %46 = arith.addf %43, %45 : vector<8x128xf32>
      %c0_18 = arith.constant 0 : index
      %c0_19 = arith.constant 0 : index
      %47 = vector.load %arg4[%c0_18, %c0_19] : memref<8x128xf32, #tpu.memory_space<vmem>>, vector<8x128xf32>
      tpu.vector_store %arg4[%c0_18, %c0_19], %46 {strides = array<i32>} : memref<8x128xf32, #tpu.memory_space<vmem>>, vector<8x128xf32>,
    } else {
    }
    %c0_i32_12 = arith.constant 0 : i32
    %35 = arith.cmpi eq, %arg1, %c0_i32_12 : i32
    %36 = arith.extui %35 : i1 to i32
    %c0_i32_13 = arith.constant 0 : i32
    %37 = arith.cmpi ne, %36, %c0_i32_13 : i32
    scf.if %37 {
      %c0_14 = arith.constant 0 : index
      %c0_15 = arith.constant 0 : index
      %38 = vector.load %arg4[%c0_14, %c0_15] : memref<8x128xf32, #tpu.memory_space<vmem>>, vector<8x128xf32>
      %cst_16 = arith.constant 4.8828125E-4 : f32
      %39 = vector.broadcast %cst_16 : f32 to vector<8x128xf32>
      %40 = arith.mulf %38, %39 : vector<8x128xf32>
      %c0_17 = arith.constant 0 : index
      %c0_18 = arith.constant 0 : index
      %41 = vector.load %arg4[%c0_17, %c0_18] : memref<8x128xf32, #tpu.memory_space<vmem>>, vector<8x128xf32>
      tpu.vector_store %arg4[%c0_17, %c0_18], %40 {strides = array<i32>} : memref<8x128xf32, #tpu.memory_space<vmem>>, vector<8x128xf32>,
    } else {
    }
    return
  }
  func.func @transform_0(%arg0: i32, %arg1: i32) -> (i32, i32) {
    %c1_i32 = arith.constant 1 : i32
    %0 = arith.muli %arg0, %c1_i32 : i32
    %1 = arith.addi %0, %arg1 : i32
    %c0_i32 = arith.constant 0 : i32
    %2 = arith.minsi %1, %c0_i32 : i32
    %c0_i32_0 = arith.constant 0 : i32
    %c0_i32_1 = arith.constant 0 : i32
    return %2, %c0_i32_0 : i32, i32
  }
  func.func @transform_1(%arg0: i32, %arg1: i32) -> (i32, i32) {
    %c1_i32 = arith.constant 1 : i32
    %0 = arith.muli %arg0, %c1_i32 : i32
    %1 = arith.addi %0, %arg1 : i32
    %c0_i32 = arith.constant 0 : i32
    %2 = arith.minsi %1, %c0_i32 : i32
    %c0_i32_0 = arith.constant 0 : i32
    %c0_i32_1 = arith.constant 0 : i32
    return %2, %c0_i32_0 : i32, i32
  }
  func.func @transform_2(%arg0: i32, %arg1: i32) -> (i32, i32) {
    %c0_i32 = arith.constant 0 : i32
    %c0_i32_0 = arith.constant 0 : i32
    return %arg0, %c0_i32 : i32, i32
  }
}

</mosaic_0001>

<llo_original>
// kernel: tpu_custom_call.1
$region0: #{tpu_custom_call.1}
  #allocation0 [shape = 'u32[]', space=smem, size = 0x4, offset = 0x4, fixed_abs, tag = 'smem constant byte address 0x4 - core index']
  #allocation1 [shape = 'u32[144,128]{1,0:T(1,128)}', space=vmem, size = 0x12000, scoped, tag = 'internal scratch']
  %s0 = inlined_call_operand.hbm [shape: f32[16,128], index: 0, kind: input, shape index: {}]
  %s1 = inlined_call_operand.hbm [shape: f32[16,128], index: 1, kind: input, shape index: {}]
  %s2 = inlined_call_operand.hbm [shape: f32[8,128], index: 2, kind: output, shape index: {}]
  %s3 = sld [smem:[#allocation0]]
  $region42: #{tpu_custom_call.1} parent=0
    _
  %s5 = ssub.s32 1, %s3
  %s6 = scalar_select 0, %s5, %s3
  $region1: #{tpu_custom_call.1} parent=0
    #allocation2 [shape = 'u8[16384]{0}', space=vmem, size = 0x4000, scoped, tag = 'input window, operand 0, single buffered']
    #allocation3 [shape = 's32[1]{0}', space=sflag, size = 0x4, scoped, tag = 'scoped memory for tpu_custom_call.1']
    #allocation4 [shape = 's32[1]{0}', space=sflag, size = 0x4, scoped, tag = 'scoped memory for tpu_custom_call.1']
    #allocation5 [shape = 'u8[16384]{0}', space=vmem, size = 0x4000, scoped, tag = 'input window, operand 1, single buffered']
    #allocation6 [shape = 's32[1]{0}', space=sflag, size = 0x4, scoped, tag = 'scoped memory for tpu_custom_call.1']
    #allocation7 [shape = 'u8[4096]{0}', space=vmem, size = 0x1000, scoped, tag = 'output window, operand 0, single buffered']
    %7 = vsyncpa [#allocation3], 0
    %8 = vsyncpa [#allocation6], 0
    %9 = vsyncpa [#allocation4], 0
    // Predicated region
    $region2: #{tpu_custom_call.1} parent=1 // pred_check
      _
    $region3: #{tpu_custom_call.1} parent=1 // pred_check_branch
      %11 = sbr.rel (0) target = $region5
    $region4: #{tpu_custom_call.1} parent=1 // pred_region
      %s12 = sadd.s32 0, 0
      %p13 = scmp.lt.s32.totalorder %s12, 0
      %s14 = scalar_select %p13, %s12, 0
      %s15 = smul.u32 4, %s14
      %s16 = ssub.s32 2, %s15
      %s17 = smul.u32 128, %s16
      %s19 = ssub.s32 512, %s17
      %20 = vsyncadd [#allocation3], %s19
      %p21 = scmp.ne.s32.totalorder 0, %s17
      %s22 = smul.addr %s15, 128
      %s23 = scalar_lea.hbm %s0, %s22
      %s24 = smul.u32 8, %s16
      %s25 = sshll.u32 [#allocation2], 4
      %s26 = int_to_ptr.vmem [resolvable:$true] %s25
      %s27 = sshll.u32 %s24, 4
      %31 = dma.hbm_to_vmem [thread:$0]  (%p21), %s23, %s27, %s26, [#allocation3], 128, 128, 8
    $region5: #{tpu_custom_call.1} parent=1 // pred_fallthru
      _
    // Predicated region
    $region6: #{tpu_custom_call.1} parent=1 // pred_check
      _
    $region7: #{tpu_custom_call.1} parent=1 // pred_check_branch
      %33 = sbr.rel (0) target = $region9
    $region8: #{tpu_custom_call.1} parent=1 // pred_region
      %s34 = sadd.s32 0, 0
      %p35 = scmp.lt.s32.totalorder %s34, 0
      %s36 = scalar_select %p35, %s34, 0
      %s37 = smul.u32 4, %s36
      %s38 = ssub.s32 2, %s37
      %s39 = smul.u32 128, %s38
      %s41 = ssub.s32 512, %s39
      %42 = vsyncadd [#allocation6], %s41
      %p43 = scmp.ne.s32.totalorder 0, %s39
      %s44 = smul.addr %s37, 128
      %s45 = scalar_lea.hbm %s1, %s44
      %s46 = smul.u32 8, %s38
      %s47 = sshll.u32 [#allocation5], 4
      %s48 = int_to_ptr.vmem [resolvable:$true] %s47
      %s49 = sshll.u32 %s46, 4
      %53 = dma.hbm_to_vmem [thread:$0]  (%p43), %s45, %s49, %s48, [#allocation6], 128, 128, 8
    $region9: #{tpu_custom_call.1} parent=1 // pred_fallthru
      _
    // Predicated region
    $region10: #{tpu_custom_call.1} parent=1 // pred_check
      _
    $region11: #{tpu_custom_call.1} parent=1 // pred_check_branch
      %55 = sbr.rel (0) target = $region13
    $region12: #{tpu_custom_call.1} parent=1 // pred_region
      %56 = dma.done [#allocation3], 512
    $region13: #{tpu_custom_call.1} parent=1 // pred_fallthru
      _
    // Predicated region
    $region14: #{tpu_custom_call.1} parent=1 // pred_check
      _
    $region15: #{tpu_custom_call.1} parent=1 // pred_check_branch
      %58 = sbr.rel (0) target = $region17
    $region16: #{tpu_custom_call.1} parent=1 // pred_region
      %59 = dma.done [#allocation6], 512
    $region17: #{tpu_custom_call.1} parent=1 // pred_fallthru
      _
    %s60 = sadd.s32 0, 0
    %p61 = scmp.lt.s32.totalorder %s60, 0
    %s62 = scalar_select %p61, %s60, 0
    %s63 = smul.u32 4, %s62
    %s64 = ssub.s32 2, %s63
    %s65 = smul.u32 128, %s64
    %s66 = sadd.s32 0, 0
    %p67 = scmp.lt.s32.totalorder %s66, 0
    %s68 = scalar_select %p67, %s66, 0
    %s69 = smul.u32 4, %s68
    %s70 = ssub.s32 2, %s69
    %s71 = smul.u32 128, %s70
    %p72 = scmp.eq.s32.totalorder 0, 0
    // Predicated region
    $region18: #{tpu_custom_call.1} parent=1 // pred_check
      %p73 = pneg %p72
    $region19: #{tpu_custom_call.1} parent=1 // pred_check_branch
      %75 = sbr.rel (%p73) target = $region21
    $region20: #{tpu_custom_call.1} parent=1 // pred_region
      %76 = vst [vmem:[#allocation7] sm:$0xff] 0.0
    $region21: #{tpu_custom_call.1} parent=1 // pred_fallthru
      _
    %v77 = vld [vmem:[#allocation2] sm:$0xff]
    %v78 = vld [vmem:[#allocation2 + $0x8] sm:$0xff]
    %v79 = vld [vmem:[#allocation2 + $0x10] sm:$0xff]
    %v80 = vld [vmem:[#allocation2 + $0x18] sm:$0xff]
    %v81 = vld [vmem:[#allocation5] sm:$0xff]
    %v82 = vld [vmem:[#allocation5 + $0x8] sm:$0xff]
    %v83 = vld [vmem:[#allocation5 + $0x10] sm:$0xff]
    %v84 = vld [vmem:[#allocation5 + $0x18] sm:$0xff]
    %v85 = vmul.f32 %v77, %v81
    %v86 = vmul.f32 %v78, %v82
    %v87 = vmul.f32 %v79, %v83
    %v88 = vmul.f32 %v80, %v84
    %v89 = vand.u32 2147483647, %v77
    %v90 = vand.u32 2147483647, %v78
    %v91 = vand.u32 2147483647, %v79
    %v92 = vand.u32 2147483647, %v80
    %v93 = vsub.f32 0.0, %v89
    %v94 = vsub.f32 0.0, %v90
    %v95 = vsub.f32 0.0, %v91
    %v96 = vsub.f32 0.0, %v92
    %v97 = vmul.f32 %v93, 1.442695
    %v98 = vpow.pop %v97
    %v99 = vmul.f32 %v94, 1.442695
    %v100 = vpow.pop %v99
    %v101 = vmul.f32 %v95, 1.442695
    %v102 = vpow.pop %v101
    %v103 = vmul.f32 %v96, 1.442695
    %v104 = vpow.pop %v103
    %v105 = vadd.f32 %v98, 1.0
    %v106 = vlog2.pop %v105
    %v107 = vmul.f32 %v106, 0.6931472
    %v108 = vmul.f32 -0.5, %v98
    %v109 = vadd.f32 %v108, 1.0
    %v110 = vmul.f32 %v109, %v98
    %v111 = vand.u32 2147483647, %v98
    %vm112 = vcmp.lt.f32.partialorder %v111, 0.0004427343
    %v113 = vsel %vm112, %v110, %v107
    %v114 = vadd.f32 %v100, 1.0
    %v115 = vlog2.pop %v114
    %v116 = vmul.f32 %v115, 0.6931472
    %v117 = vmul.f32 -0.5, %v100
    %v118 = vadd.f32 %v117, 1.0
    %v119 = vmul.f32 %v118, %v100
    %v120 = vand.u32 2147483647, %v100
    %vm121 = vcmp.lt.f32.partialorder %v120, 0.0004427343
    %v122 = vsel %vm121, %v119, %v116
    %v123 = vadd.f32 %v102, 1.0
    %v124 = vlog2.pop %v123
    %v125 = vmul.f32 %v124, 0.6931472
    %v126 = vmul.f32 -0.5, %v102
    %v127 = vadd.f32 %v126, 1.0
    %v128 = vmul.f32 %v127, %v102
    %v129 = vand.u32 2147483647, %v102
    %vm130 = vcmp.lt.f32.partialorder %v129, 0.0004427343
    %v131 = vsel %vm130, %v128, %v125
    %v132 = vadd.f32 %v104, 1.0
    %v133 = vlog2.pop %v132
    %v134 = vmul.f32 %v133, 0.6931472
    %v135 = vmul.f32 -0.5, %v104
    %v136 = vadd.f32 %v135, 1.0
    %v137 = vmul.f32 %v136, %v104
    %v138 = vand.u32 2147483647, %v104
    %vm139 = vcmp.lt.f32.partialorder %v138, 0.0004427343
    %v140 = vsel %vm139, %v137, %v134
    %v141 = vmax.f32 %v77, 0.0
    %v142 = vmax.f32 %v78, 0.0
    %v143 = vmax.f32 %v79, 0.0
    %v144 = vmax.f32 %v80, 0.0
    %v145 = vsub.f32 %v141, %v85
    %v146 = vsub.f32 %v142, %v86
    %v147 = vsub.f32 %v143, %v87
    %v148 = vsub.f32 %v144, %v88
    %v149 = vadd.f32 %v145, %v113
    %v150 = vadd.f32 %v146, %v122
    %v151 = vadd.f32 %v147, %v131
    %v152 = vadd.f32 %v148, %v140
    %v153 = vmul.f32 %v85, 2.0
    %v154 = vmul.f32 %v86, 2.0
    %v155 = vmul.f32 %v87, 2.0
    %v156 = vmul.f32 %v88, 2.0
    %v157 = vsub.f32 %v77, %v153
    %v158 = vsub.f32 %v78, %v154
    %v159 = vsub.f32 %v79, %v155
    %v160 = vsub.f32 %v80, %v156
    %v161 = vmin.f32 %v157, 0.0
    %v162 = vmin.f32 %v158, 0.0
    %v163 = vmin.f32 %v159, 0.0
    %v164 = vmin.f32 %v160, 0.0
    %v165 = vsub.f32 %v161, %v113
    %v166 = vsub.f32 %v162, %v122
    %v167 = vsub.f32 %v163, %v131
    %v168 = vsub.f32 %v164, %v140
    %v169 = vmul.f32 %v165, 2.0
    %v170 = vmul.f32 %v166, 2.0
    %v171 = vmul.f32 %v167, 2.0
    %v172 = vmul.f32 %v168, 2.0
    %v173 = vmul.f32 %v169, 1.442695
    %v174 = vpow.pop %v173
    %v175 = vmul.f32 %v170, 1.442695
    %v176 = vpow.pop %v175
    %v177 = vmul.f32 %v171, 1.442695
    %v178 = vpow.pop %v177
    %v179 = vmul.f32 %v172, 1.442695
    %v180 = vpow.pop %v179
    %v181 = vmul.f32 %v174, %v149
    %v182 = vmul.f32 %v176, %v150
    %v183 = vmul.f32 %v178, %v151
    %v184 = vmul.f32 %v180, %v152
    %s185 = sadd.s32 0, 0
    %s186 = smul.u32 %s185, 32
    %s187 = ssub.s32 16, %s186
    %p188 = scmp.lt.s32.totalorder %s185, 0
    // Predicated region
    $region22: #{tpu_custom_call.1} parent=1 // pred_check
      %p189 = pneg %p188
    $region23: #{tpu_custom_call.1} parent=1 // pred_check_branch
      %191 = sbr.rel (%p189) target = $region25
    $region24: #{tpu_custom_call.1} parent=1 // pred_region
      %v192 = vld [vmem:[#allocation7] sm:$0xff]
      %v193 = vadd.f32 %v181, %v182
      %v194 = vadd.f32 %v193, %v183
      %v195 = vadd.f32 %v194, %v184
      %v196 = vadd.f32 %v192, %v195
      %197 = vst [vmem:[#allocation7] sm:$0xff] %v196
    $region25: #{tpu_custom_call.1} parent=1 // pred_fallthru
      _
    %p198 = scmp.ge.s32.totalorder %s185, 0
    // Predicated region
    $region26: #{tpu_custom_call.1} parent=1 // pred_check
      %p199 = pneg %p198
    $region27: #{tpu_custom_call.1} parent=1 // pred_check_branch
      %201 = sbr.rel (%p199) target = $region29
    $region28: #{tpu_custom_call.1} parent=1 // pred_region
      %v202 = vlaneseq
      %v203 = vshrl.u32 %v202, 7
      %v204 = vadd.s32 %v203, 8
      %v205 = vadd.s32 %v203, 16
      %v206 = vadd.s32 %v203, 24
      %v207 = vstv %s187
      %vm208 = vcmp.lt.s32.totalorder %v203, %v207
      %vm209 = vcmp.lt.s32.totalorder %v204, %v207
      %vm210 = vcmp.lt.s32.totalorder %v205, %v207
      %vm211 = vcmp.lt.s32.totalorder %v206, %v207
      %v212 = vsel %vm208, %v181, 0.0
      %v213 = vsel %vm209, %v182, 0.0
      %v214 = vsel %vm210, %v183, 0.0
      %v215 = vsel %vm211, %v184, 0.0
      %v216 = vld [vmem:[#allocation7] sm:$0xff]
      %v217 = vadd.f32 %v212, %v213
      %v218 = vadd.f32 %v217, %v214
      %v219 = vadd.f32 %v218, %v215
      %v220 = vadd.f32 %v216, %v219
      %221 = vst [vmem:[#allocation7] sm:$0xff] %v220
    $region29: #{tpu_custom_call.1} parent=1 // pred_fallthru
      _
    // Predicated region
    $region30: #{tpu_custom_call.1} parent=1 // pred_check
      %p222 = pneg %p72
    $region31: #{tpu_custom_call.1} parent=1 // pred_check_branch
      %224 = sbr.rel (%p222) target = $region33
    $region32: #{tpu_custom_call.1} parent=1 // pred_region
      %v225 = vld [vmem:[#allocation7] sm:$0xff]
      %v226 = vmul.f32 %v225, 0.00048828125
      %227 = vst [vmem:[#allocation7] sm:$0xff] %v226
    $region33: #{tpu_custom_call.1} parent=1 // pred_fallthru
      _
    // Predicated region
    $region34: #{tpu_custom_call.1} parent=1 // pred_check
      _
    $region35: #{tpu_custom_call.1} parent=1 // pred_check_branch
      %229 = sbr.rel (0) target = $region37
    $region36: #{tpu_custom_call.1} parent=1 // pred_region
      %s231 = ssub.s32 128, 128
      %232 = vsyncadd [#allocation4], %s231
      %s234 = sshll.u32 [#allocation7], 4
      %s235 = int_to_ptr.vmem [resolvable:$true] %s234
      %237 = dma.vmem_to_hbm [thread:$0]  %s235, 128, %s2, [#allocation4]
    $region37: #{tpu_custom_call.1} parent=1 // pred_fallthru
      _
    // Predicated region
    $region38: #{tpu_custom_call.1} parent=1 // pred_check
      _
    $region39: #{tpu_custom_call.1} parent=1 // pred_check_branch
      %239 = sbr.rel (0) target = $region41
    $region40: #{tpu_custom_call.1} parent=1 // pred_region
      %240 = dma.done [#allocation4], 128
    $region41: #{tpu_custom_call.1} parent=1 // pred_fallthru
      _
    %241 = vsyncpa [#allocation3], 1
    %242 = vsyncpa [#allocation6], 1
    %243 = vsyncpa [#allocation4], 1

</llo_original>
